<compile_context>
chip_gen: v6e
topology: v6e:2x2x1
jax: 0.10.0
libtpu: 0.0.40
codegen_flags: <defaults>
</compile_context>

<pallas_src>
import math
import functools

import jax
import jax.numpy as jnp
from jax.experimental import pallas as pl
from jax.experimental.pallas import tpu as pltpu


# ---------------------------------------------------------------------------
# Generation-aware sizing helpers
# ---------------------------------------------------------------------------
@functools.lru_cache(maxsize=None)
def _vmem_limit_bytes():
    """Scoped-VMEM budget: ~75% of capacity on 128 MiB parts (v5e/v6e),
    ~70% on 64 MiB/TC (v7x); conservative ~45 MiB fallback if the query fails."""
    cap = 64 * 1024 * 1024
    try:
        cap = int(getattr(pltpu.get_tpu_info(), "vmem_capacity_bytes", cap))
    except Exception:
        pass
    frac = 0.75 if cap >= 96 * 1024 * 1024 else 0.70
    return int(cap * frac)


def _pick_tile(n, per_row_bytes, budget_bytes,
               candidates=(2048, 1024, 512, 256, 128, 64, 32, 16, 8)):
    """Largest candidate tile dividing n whose per-step footprint fits the budget."""
    for c in candidates:
        if n % c == 0 and c * per_row_bytes <= budget_bytes:
            return c
    # TODO(synk): pad + mask ragged n instead of falling back to a single block.
    return n


def _const_spec(shape):
    """BlockSpec for a grid-constant operand (weights / bias / gamma / beta).
    Single-buffered (halved VMEM) when the installed Pallas supports pipeline_mode."""
    index_map = lambda *_: (0,) * len(shape)
    try:
        return pl.BlockSpec(shape, index_map, pipeline_mode=pl.Buffered(1))
    except Exception:
        return pl.BlockSpec(shape, index_map)


# ---------------------------------------------------------------------------
# Kernel 1: row-tiled linear projection  y = (x @ W + b)  -> bf16
#   x: (N, Din) fp32, W: (Din, Dout) bf16 (pre-cast once), b: (1, Dout) fp32
# ---------------------------------------------------------------------------
def _linear_kernel(x_ref, w_ref, b_ref, o_ref):
    x = x_ref[...].astype(jnp.bfloat16)                        # bf16 MXU operands
    y = jnp.dot(x, w_ref[...], preferred_element_type=jnp.float32)
    o_ref[...] = (y + b_ref[...]).astype(o_ref.dtype)          # fp32 bias add, bf16 store


def linear(x, w_bf16, b2d, out_dtype=jnp.bfloat16):
    n, din = x.shape
    dout = w_bf16.shape[1]
    vmem = _vmem_limit_bytes()
    x_bytes = jnp.dtype(x.dtype).itemsize
    out_bytes = jnp.dtype(out_dtype).itemsize
    resident = 2 * (din * dout * 2 + dout * 4)                 # weight + bias buffers
    per_row = 2 * (din * x_bytes + dout * out_bytes)           # double-buffered x / out rows
    budget = max(vmem - resident - (2 << 20), 8 * per_row)
    tm = _pick_tile(n, per_row, budget)
    return pl.pallas_call(
        _linear_kernel,
        out_shape=jax.ShapeDtypeStruct((n, dout), out_dtype),
        grid=(n // tm,),
        in_specs=[
            pl.BlockSpec((tm, din), lambda i: (i, 0)),         # row tile of activations
            _const_spec((din, dout)),                          # full weight, single-buffered
            _const_spec((1, dout)),
        ],
        out_specs=pl.BlockSpec((tm, dout), lambda i: (i, 0)),
        compiler_params=pltpu.CompilerParams(
            dimension_semantics=("parallel",),
            vmem_limit_bytes=vmem),
    )(x, w_bf16, b2d)


# ---------------------------------------------------------------------------
# Kernel 2: per-(head, batch, q-tile) scaled-dot-product attention.
#   Head-major bf16 inputs: q (H, B, L, Dk), k (H, B, T, Dk), v (H, B, T, Dv).
#   Grid = (H, B, L/tl), all parallel.  The K/V block index is constant across
#   the q-tile axis, so Pallas skips re-fetching them between consecutive steps.
#   Outputs: attn map (H, B, L, T) fp32 (exact softmax), out (H, B, L, Dv) bf16.
# ---------------------------------------------------------------------------
def _attn_kernel(q_ref, k_ref, v_ref, attn_ref, out_ref, *, scale):
    q = q_ref[0, 0]                                            # (tl, Dk) bf16
    k = k_ref[0, 0]                                            # (T,  Dk) bf16
    v = v_ref[0, 0]                                            # (T,  Dv) bf16
    # contracting-last-dims matmul — no k.T relayout; fp32 accumulation
    s = jnp.einsum('ld,td->lt', q, k,
                   preferred_element_type=jnp.float32) * scale  # (tl, T) fp32
    m = jnp.max(s, axis=-1, keepdims=True)
    e = jnp.exp(s - m)
    p = e / jnp.sum(e, axis=-1, keepdims=True)                 # EXACT softmax (fp32)
    attn_ref[0, 0] = p
    o = jnp.dot(p.astype(jnp.bfloat16), v, preferred_element_type=jnp.float32)
    out_ref[0, 0] = o.astype(out_ref.dtype)                    # bf16 per-head output


def attention(q_hb, k_hb, v_hb):
    H, B, L, dk = q_hb.shape
    T, dv = k_hb.shape[2], v_hb.shape[3]
    vmem = _vmem_limit_bytes()
    resident = 2 * 2 * T * (dk + dv) + (2 << 20)               # double-buffered bf16 K/V + slack
    per_row = 2 * (2 * dk + 4 * T + 2 * dv) + 3 * 4 * T        # q/attn/out rows + fp32 temporaries
    budget = max(vmem - resident, 8 * per_row)
    tl = _pick_tile(L, per_row, budget,
                    candidates=(512, 256, 128, 64, 32, 16, 8))
    kernel = functools.partial(_attn_kernel, scale=1.0 / math.sqrt(dk))
    return pl.pallas_call(
        kernel,
        out_shape=(
            jax.ShapeDtypeStruct((H, B, L, T), jnp.float32),   # softmax map (module output)
            jax.ShapeDtypeStruct((H, B, L, dv), jnp.bfloat16), # per-head attention output
        ),
        grid=(H, B, L // tl),
        in_specs=[
            pl.BlockSpec((1, 1, tl, dk), lambda h, b, l: (h, b, l, 0)),
            pl.BlockSpec((1, 1, T, dk), lambda h, b, l: (h, b, 0, 0)),
            pl.BlockSpec((1, 1, T, dv), lambda h, b, l: (h, b, 0, 0)),
        ],
        out_specs=(
            pl.BlockSpec((1, 1, tl, T), lambda h, b, l: (h, b, l, 0)),
            pl.BlockSpec((1, 1, tl, dv), lambda h, b, l: (h, b, l, 0)),
        ),
        compiler_params=pltpu.CompilerParams(
            dimension_semantics=("parallel", "parallel", "parallel"),
            vmem_limit_bytes=vmem),
    )(q_hb, k_hb, v_hb)


# ---------------------------------------------------------------------------
# Kernel 3: row-tiled final FC + residual add + LayerNorm (eps = 1e-5, fp32 math)
# ---------------------------------------------------------------------------
def _fc_ln_kernel(x_ref, w_ref, b_ref, res_ref, g_ref, beta_ref, o_ref):
    x = x_ref[...].astype(jnp.bfloat16)
    y = jnp.dot(x, w_ref[...], preferred_element_type=jnp.float32) + b_ref[...]
    z = y + res_ref[...]                                       # residual (dropout == identity)
    mean = jnp.mean(z, axis=-1, keepdims=True)
    var = jnp.mean((z - mean) * (z - mean), axis=-1, keepdims=True)
    zn = (z - mean) * jax.lax.rsqrt(var + 1e-5)
    o_ref[...] = zn * g_ref[...] + beta_ref[...]


def fc_residual_layernorm(x, w_bf16, b2d, residual, gamma2d, beta2d):
    n, din = x.shape
    dout = w_bf16.shape[1]
    vmem = _vmem_limit_bytes()
    x_bytes = jnp.dtype(x.dtype).itemsize
    resident = 2 * (din * dout * 2 + 3 * dout * 4)
    per_row = 2 * (din * x_bytes + 2 * dout * 4)               # x + residual + out rows
    budget = max(vmem - resident - (2 << 20), 8 * per_row)
    tm = _pick_tile(n, per_row, budget)
    return pl.pallas_call(
        _fc_ln_kernel,
        out_shape=jax.ShapeDtypeStruct((n, dout), jnp.float32),
        grid=(n // tm,),
        in_specs=[
            pl.BlockSpec((tm, din), lambda i: (i, 0)),
            _const_spec((din, dout)),
            _const_spec((1, dout)),
            pl.BlockSpec((tm, dout), lambda i: (i, 0)),
            _const_spec((1, dout)),
            _const_spec((1, dout)),
        ],
        out_specs=pl.BlockSpec((tm, dout), lambda i: (i, 0)),
        compiler_params=pltpu.CompilerParams(
            dimension_semantics=("parallel",),
            vmem_limit_bytes=vmem),
    )(x, w_bf16, b2d, residual, gamma2d, beta2d)


# ---------------------------------------------------------------------------
# One-time parameter preparation: concatenate fused projection weights and
# cache bf16 copies (removes per-forward-call concat + fp32->bf16 casts).
# ---------------------------------------------------------------------------
def prepare_params(params):
    def b2d(b):
        return jnp.asarray(b, jnp.float32).reshape(1, -1)
    w_q, w_k, w_v = params["w_qs"], params["w_ks"], params["w_vs"]
    b_q, b_k, b_v = params["b_qs"], params["b_ks"], params["b_vs"]
    return {
        "w_qkv": jnp.concatenate([w_q, w_k, w_v], axis=1).astype(jnp.bfloat16),
        "b_qkv": b2d(jnp.concatenate([b_q, b_k, b_v], axis=0)),
        "w_kv": jnp.concatenate([w_k, w_v], axis=1).astype(jnp.bfloat16),
        "b_kv": b2d(jnp.concatenate([b_k, b_v], axis=0)),
        "w_q": w_q.astype(jnp.bfloat16), "b_q": b2d(b_q),
        "w_k": w_k.astype(jnp.bfloat16), "b_k": b2d(b_k),
        "w_v": w_v.astype(jnp.bfloat16), "b_v": b2d(b_v),
        "w_fc": params["w_fc"].astype(jnp.bfloat16), "b_fc": b2d(params["b_fc"]),
        "ln_gamma": b2d(params["ln_gamma"]), "ln_beta": b2d(params["ln_beta"]),
    }


# ---------------------------------------------------------------------------
# Full forward pass (eval mode: dropout == identity, mask=None)
# ---------------------------------------------------------------------------
def multi_head_attention(q, k, v, prepared, n_head, d_k, d_v):
    B, L, d_model = q.shape
    T = k.shape[1]
    H = n_head
    dq, dv = H * d_k, H * d_v
    residual = q

    if q is k and k is v:
        # Self-attention: fused Q/K/V projection — activation read from HBM once.
        y = linear(q.reshape(B * L, d_model), prepared["w_qkv"], prepared["b_qkv"])
        q_flat, k_flat, v_flat = y[:, :dq], y[:, dq:2 * dq], y[:, 2 * dq:]
    elif k is v:
        # Cross-attention with a shared memory tensor: fuse the K and V projections.
        q_flat = linear(q.reshape(B * L, d_model), prepared["w_q"], prepared["b_q"])
        ykv = linear(k.reshape(B * T, d_model), prepared["w_kv"], prepared["b_kv"])
        k_flat, v_flat = ykv[:, :dq], ykv[:, dq:]
    else:
        q_flat = linear(q.reshape(B * L, d_model), prepared["w_q"], prepared["b_q"])
        k_flat = linear(k.reshape(B * T, d_model), prepared["w_k"], prepared["b_k"])
        v_flat = linear(v.reshape(B * T, d_model), prepared["w_v"], prepared["b_v"])

    # Head-major bf16 pre-layout so every attention grid step gets a whole
    # lane-contiguous (rows, d) tile (no sub-128-lane head slicing in-kernel).
    q_hb = q_flat.reshape(B, L, H, d_k).transpose(2, 0, 1, 3)
    k_hb = k_flat.reshape(B, T, H, d_k).transpose(2, 0, 1, 3)
    v_hb = v_flat.reshape(B, T, H, d_v).transpose(2, 0, 1, 3)

    attn, out_heads = attention(q_hb, k_hb, v_hb)              # (H,B,L,T) f32, (H,B,L,dv) bf16

    out_cat = out_heads.transpose(1, 2, 0, 3).reshape(B * L, H * d_v)
    out = fc_residual_layernorm(out_cat, prepared["w_fc"], prepared["b_fc"],
                                residual.reshape(B * L, d_model),
                                prepared["ln_gamma"], prepared["ln_beta"])
    return out.reshape(B, L, d_model), attn


# ---------------------------------------------------------------------------
# Pure-JAX fp32 reference (mirrors the PyTorch module forward, eval mode)
# ---------------------------------------------------------------------------
def reference_mha(q, k, v, params, n_head, d_k, d_v):
    B, L, d_model = q.shape
    T = k.shape[1]
    q_p = (q @ params["w_qs"] + params["b_qs"]).reshape(B, L, n_head, d_k).transpose(2, 0, 1, 3)
    k_p = (k @ params["w_ks"] + params["b_ks"]).reshape(B, T, n_head, d_k).transpose(2, 0, 1, 3)
    v_p = (v @ params["w_vs"] + params["b_vs"]).reshape(B, T, n_head, d_v).transpose(2, 0, 1, 3)
    s = jnp.einsum('hblk,hbtk->hblt', q_p, k_p) / math.sqrt(d_k)
    attn = jax.nn.softmax(s, axis=-1)
    o = jnp.einsum('hblt,hbtv->hblv', attn, v_p)
    o = o.transpose(1, 2, 0, 3).reshape(B, L, n_head * d_v)
    y = o @ params["w_fc"] + params["b_fc"] + q
    mean = y.mean(-1, keepdims=True)
    var = ((y - mean) ** 2).mean(-1, keepdims=True)
    out = (y - mean) / jnp.sqrt(var + 1e-5) * params["ln_gamma"] + params["ln_beta"]
    return out, attn


# ---------------------------------------------------------------------------
# Deterministic parameter construction (matches the module's init distributions)
# ---------------------------------------------------------------------------
def init_params(key, n_head, d_model, d_k, d_v):
    ks = jax.random.split(key, 8)
    std_qk = math.sqrt(2.0 / (d_model + d_k))
    std_v = math.sqrt(2.0 / (d_model + d_v))
    xavier_std = math.sqrt(2.0 / (n_head * d_v + d_model))
    bnd_in = 1.0 / math.sqrt(d_model)
    bnd_fc = 1.0 / math.sqrt(n_head * d_v)
    return {
        "w_qs": std_qk * jax.random.normal(ks[0], (d_model, n_head * d_k), jnp.float32),
        "b_qs": jax.random.uniform(ks[1], (n_head * d_k,), jnp.float32, -bnd_in, bnd_in),
        "w_ks": std_qk * jax.random.normal(ks[2], (d_model, n_head * d_k), jnp.float32),
        "b_ks": jax.random.uniform(ks[3], (n_head * d_k,), jnp.float32, -bnd_in, bnd_in),
        "w_vs": std_v * jax.random.normal(ks[4], (d_model, n_head * d_v), jnp.float32),
        "b_vs": jax.random.uniform(ks[5], (n_head * d_v,), jnp.float32, -bnd_in, bnd_in),
        "w_fc": xavier_std * jax.random.normal(ks[6], (n_head * d_v, d_model), jnp.float32),
        "b_fc": jax.random.uniform(ks[7], (d_model,), jnp.float32, -bnd_fc, bnd_fc),
        "ln_gamma": jnp.ones((d_model,), jnp.float32),
        "ln_beta": jnp.zeros((d_model,), jnp.float32),
    }


def _check(out, attn, ref_out, ref_attn, B, L, T, n_head, d_model):
    assert out.shape == (B, L, d_model)
    assert attn.shape == (n_head, B, L, T)
    assert bool(jnp.all(jnp.isfinite(out)))
    # exact softmax: rows sum to 1 up to fp32 rounding
    assert bool(jnp.allclose(jnp.sum(attn, axis=-1), 1.0, atol=1e-3))
    # loose tolerances vs fp32 reference (bf16 matmul operands / bf16 hand-offs)
    assert float(jnp.max(jnp.abs(attn - ref_attn))) < 0.1
    assert float(jnp.max(jnp.abs(out - ref_out))) < 0.3


if __name__ == "__main__":
    B, L, T = 2, 8, 8
    n_head, d_model, d_k, d_v = 4, 32, 8, 8

    key = jax.random.PRNGKey(0)
    kx, km, kvk, kp = jax.random.split(key, 4)
    x = jax.random.normal(kx, (B, L, d_model), jnp.float32)
    mem = jax.random.normal(km, (B, T, d_model), jnp.float32)
    v_in = jax.random.normal(kvk, (B, T, d_model), jnp.float32)

    params = init_params(kp, n_head, d_model, d_k, d_v)
    prepared = prepare_params(params)          # one-time concat + bf16 cast of weights

    # --- Self-attention (fused QKV projection path) ---
    out, attn = multi_head_attention(x, x, x, prepared, n_head, d_k, d_v)
    out, attn = jax.block_until_ready(out), jax.block_until_ready(attn)
    ref_out, ref_attn = reference_mha(x, x, x, params, n_head, d_k, d_v)
    _check(out, attn, ref_out, ref_attn, B, L, T, n_head, d_model)

    # --- Cross-attention, shared K/V source (fused KV projection path) ---
    out2, attn2 = multi_head_attention(x, mem, mem, prepared, n_head, d_k, d_v)
    out2, attn2 = jax.block_until_ready(out2), jax.block_until_ready(attn2)
    ref_out2, ref_attn2 = reference_mha(x, mem, mem, params, n_head, d_k, d_v)
    _check(out2, attn2, ref_out2, ref_attn2, B, L, T, n_head, d_model)

    # --- Cross-attention, distinct K and V (separate projections path) ---
    out3, attn3 = multi_head_attention(x, mem, v_in, prepared, n_head, d_k, d_v)
    out3, attn3 = jax.block_until_ready(out3), jax.block_until_ready(attn3)
    ref_out3, ref_attn3 = reference_mha(x, mem, v_in, params, n_head, d_k, d_v)
    _check(out3, attn3, ref_out3, ref_attn3, B, L, T, n_head, d_model)

    print("KERNEL_OK")
</pallas_src>

<mosaic_0001>
module attributes {stable_mosaic.version = 11 : i64} {
  func.func @_linear_kernel(%arg0: i32, %arg1: memref<16x32xf32, #tpu.memory_space<vmem>>, %arg2: memref<32x96xbf16, #tpu.memory_space<vmem>>, %arg3: memref<1x96xf32, #tpu.memory_space<vmem>>, %arg4: memref<16x96xbf16, #tpu.memory_space<vmem>>) attributes {dimension_semantics = [#tpu.dimension_semantics<parallel>], iteration_bounds = array<i64: 1>, scalar_prefetch = 0 : i64, scratch_operands = 0 : i64, tpu.core_type = #tpu.core_type<tc>, window_params = [{transform_indices = @transform_0, window_bounds = array<i64: 16, 32>}, {pipeline_mode = #tpu.pipeline_mode<synchronous>, transform_indices = @transform_1, window_bounds = array<i64: 32, 96>}, {pipeline_mode = #tpu.pipeline_mode<synchronous>, transform_indices = @transform_2, window_bounds = array<i64: 1, 96>}, {transform_indices = @transform_3, window_bounds = array<i64: 16, 96>}]} {
    %c0 = arith.constant 0 : index
    %c0_0 = arith.constant 0 : index
    %0 = vector.load %arg1[%c0, %c0_0] : memref<16x32xf32, #tpu.memory_space<vmem>>, vector<16x32xf32>
    %1 = arith.truncf %0 : vector<16x32xf32> to vector<16x32xbf16>
    %c0_1 = arith.constant 0 : index
    %c0_2 = arith.constant 0 : index
    %2 = vector.load %arg2[%c0_1, %c0_2] : memref<32x96xbf16, #tpu.memory_space<vmem>>, vector<32x96xbf16>
    %cst = arith.constant dense<0.000000e+00> : vector<16x96xf32>
    %3 = tpu.matmul %1, %2, %cst {dimension_numbers = #tpu.dot_dimension_numbers<[1], [0], [0], [1], [0, 0, 1, 1], [], []>} : vector<16x32xbf16>, vector<32x96xbf16>, vector<16x96xf32> -> vector<16x96xf32>
    %c0_3 = arith.constant 0 : index
    %c0_4 = arith.constant 0 : index
    %4 = vector.load %arg3[%c0_3, %c0_4] : memref<1x96xf32, #tpu.memory_space<vmem>>, vector<1x96xf32>
    %5 = vector.broadcast %4 : vector<1x96xf32> to vector<16x96xf32>
    %6 = arith.addf %3, %5 : vector<16x96xf32>
    %7 = arith.truncf %6 : vector<16x96xf32> to vector<16x96xbf16>
    %c0_5 = arith.constant 0 : index
    %c0_6 = arith.constant 0 : index
    %8 = vector.load %arg4[%c0_5, %c0_6] : memref<16x96xbf16, #tpu.memory_space<vmem>>, vector<16x96xbf16>
    tpu.vector_store %arg4[%c0_5, %c0_6], %7 {strides = array<i32>} : memref<16x96xbf16, #tpu.memory_space<vmem>>, vector<16x96xbf16>,
    return
  }
  func.func @transform_0(%arg0: i32) -> (i32, i32) {
    %c0_i32 = arith.constant 0 : i32
    %c0_i32_0 = arith.constant 0 : i32
    return %arg0, %c0_i32 : i32, i32
  }
  func.func @transform_1(%arg0: i32) -> (i32, i32) {
    %c0_i32 = arith.constant 0 : i32
    %c0_i32_0 = arith.constant 0 : i32
    %c0_i32_1 = arith.constant 0 : i32
    return %c0_i32, %c0_i32_0 : i32, i32
  }
  func.func @transform_2(%arg0: i32) -> (i32, i32) {
    %c0_i32 = arith.constant 0 : i32
    %c0_i32_0 = arith.constant 0 : i32
    %c0_i32_1 = arith.constant 0 : i32
    return %c0_i32, %c0_i32_0 : i32, i32
  }
  func.func @transform_3(%arg0: i32) -> (i32, i32) {
    %c0_i32 = arith.constant 0 : i32
    %c0_i32_0 = arith.constant 0 : i32
    return %arg0, %c0_i32 : i32, i32
  }
}

</mosaic_0001>

<llo_original>
// kernel: tpu_custom_call.1
$region0: #{tpu_custom_call.1}
  #allocation0 [shape = 'u32[]', space=smem, size = 0x4, offset = 0x4, fixed_abs, tag = 'smem constant byte address 0x4 - core index']
  #allocation1 [shape = 'u32[144,128]{1,0:T(1,128)}', space=vmem, size = 0x12000, scoped, tag = 'internal scratch']
  %s0 = inlined_call_operand.hbm [shape: f32[16,32], index: 0, kind: input, shape index: {}]
  %s1 = inlined_call_operand.hbm [shape: bf16[32,96], index: 1, kind: input, shape index: {}]
  %s2 = inlined_call_operand.vmem [shape: f32[1,96], index: 2, kind: input, shape index: {}]
  %s3 = inlined_call_operand.hbm [shape: bf16[16,96], index: 3, kind: output, shape index: {}]
  %s4 = sld [smem:[#allocation0]]
  $region30: #{tpu_custom_call.1} parent=0
    _
  %s6 = ssub.s32 1, %s4
  %s7 = scalar_select 0, %s6, %s4
  $region1: #{tpu_custom_call.1} parent=0
    #allocation2 [shape = 'u8[8192]{0}', space=vmem, size = 0x2000, scoped, tag = 'input window, operand 0, single buffered']
    #allocation3 [shape = 's32[1]{0}', space=sflag, size = 0x4, scoped, tag = 'scoped memory for tpu_custom_call.1']
    #allocation4 [shape = 's32[1]{0}', space=sflag, size = 0x4, scoped, tag = 'scoped memory for tpu_custom_call.1']
    #allocation5 [shape = 'u8[8192]{0}', space=vmem, size = 0x2000, scoped, tag = 'input window, operand 1, single buffered']
    #allocation6 [shape = 's32[1]{0}', space=sflag, size = 0x4, scoped, tag = 'scoped memory for tpu_custom_call.1']
    #allocation7 [shape = 'u8[4096]{0}', space=vmem, size = 0x1000, scoped, tag = 'output window, operand 0, single buffered']
    %8 = vsyncpa [#allocation3], 0
    %9 = vsyncpa [#allocation6], 0
    %10 = vsyncpa [#allocation4], 0
    // Predicated region
    $region2: #{tpu_custom_call.1} parent=1 // pred_check
      _
    $region3: #{tpu_custom_call.1} parent=1 // pred_check_branch
      %12 = sbr.rel (0) target = $region5
    $region4: #{tpu_custom_call.1} parent=1 // pred_region
      %s14 = ssub.s32 256, 256
      %15 = vsyncadd [#allocation3], %s14
      %s16 = sshll.u32 [#allocation2], 4
      %s17 = int_to_ptr.vmem [resolvable:$true] %s16
      %22 = dma.hbm_to_vmem [thread:$0]  %s0, 256, %s17, [#allocation3], 128, 128, 8
    $region5: #{tpu_custom_call.1} parent=1 // pred_fallthru
      _
    // Predicated region
    $region6: #{tpu_custom_call.1} parent=1 // pred_check
      _
    $region7: #{tpu_custom_call.1} parent=1 // pred_check_branch
      %24 = sbr.rel (0) target = $region9
    $region8: #{tpu_custom_call.1} parent=1 // pred_region
      %s26 = ssub.s32 256, 256
      %27 = vsyncadd [#allocation6], %s26
      %s28 = sshll.u32 [#allocation5], 4
      %s29 = int_to_ptr.vmem [resolvable:$true] %s28
      %34 = dma.hbm_to_vmem [thread:$0]  %s1, 256, %s29, [#allocation6], 64, 64, 4
    $region9: #{tpu_custom_call.1} parent=1 // pred_fallthru
      _
    // Predicated region
    $region10: #{tpu_custom_call.1} parent=1 // pred_check
      _
    $region11: #{tpu_custom_call.1} parent=1 // pred_check_branch
      %36 = sbr.rel (0) target = $region13
    $region12: #{tpu_custom_call.1} parent=1 // pred_region
      _
    $region13: #{tpu_custom_call.1} parent=1 // pred_fallthru
      _
    // Predicated region
    $region14: #{tpu_custom_call.1} parent=1 // pred_check
      _
    $region15: #{tpu_custom_call.1} parent=1 // pred_check_branch
      %38 = sbr.rel (0) target = $region17
    $region16: #{tpu_custom_call.1} parent=1 // pred_region
      %39 = dma.done [#allocation3], 256
    $region17: #{tpu_custom_call.1} parent=1 // pred_fallthru
      _
    // Predicated region
    $region18: #{tpu_custom_call.1} parent=1 // pred_check
      _
    $region19: #{tpu_custom_call.1} parent=1 // pred_check_branch
      %41 = sbr.rel (0) target = $region21
    $region20: #{tpu_custom_call.1} parent=1 // pred_region
      %42 = dma.done [#allocation6], 256
    $region21: #{tpu_custom_call.1} parent=1 // pred_fallthru
      _
    %v44 = vld [vmem:[#allocation2] sm:$0xff]
    %v45 = vld [vmem:[#allocation2 + $0x8] sm:$0xff]
    %v46 = vpack.c.bf16 %v45, %v44
    %v47 = vld [vmem:[#allocation5] sm:$0xf]
    %v48 = vld [vmem:[#allocation5 + $0x4] sm:$0xf]
    %v49 = vld [vmem:[#allocation5 + $0x8] sm:$0xf]
    %v50 = vld [vmem:[#allocation5 + $0xc] sm:$0xf]
    %v51 = vld [vmem:[%s2] sm:$0x1]
    %v53 = vlaneseq
    %v54 = vshrl.u32 %v53, 7
    %v55 = vsub.s32 0, %v54
    %v56 = vrot.slane %v51, %v55
    %v62 = vunpack.c.l.b16 %v47
    %v63 = vunpack.c.l.b16 %v48
    %v64 = vunpack.c.l.b16 %v49
    %v65 = vunpack.c.l.b16 %v50
    %v66 = vpack.c.b16 %v63, %v62
    %v67 = vpack.c.b16 %v65, %v64
    %vm70 = vcmask 261120
    %v72 = vsel %vm70, %v46, 0
    %74 = vmatprep.subr.bf16.mxu0 0
    %75 = vmatpush1.bf16.msra.mxu0 0
    %76 = vmatprep.subr.bf16.mxu0 0
    %77 = vmatpush1.bf16.msra.mxu0 0
    %78 = vmatprep.subr.bf16.mxu0 0
    %79 = vmatpush1.bf16.msra.mxu0 0
    %80 = vmatprep.subr.bf16.mxu0 0
    %81 = vmatpush1.bf16.msra.mxu0 0
    %82 = vmatprep.subr.bf16.mxu0 0
    %83 = vmatpush1.bf16.msra.mxu0 0
    %84 = vmatprep.subr.bf16.mxu0 0
    %85 = vmatpush1.bf16.msra.mxu0 0
    %86 = vmatprep.subr.bf16.mxu0 0
    %87 = vmatpush1.bf16.msra.mxu0 %v67
    %88 = vmatprep.subr.bf16.mxu0 0
    %89 = vmatpush1.bf16.msra.mxu0 %v66
    %90 = vmatprep.subr.bf16.mxu0 0
    %91 = vmatpush2.bf16.msra.mxu0 0
    %92 = vmatprep.subr.bf16.mxu0 0
    %93 = vmatpush2.bf16.msra.mxu0 0
    %94 = vmatprep.subr.bf16.mxu0 0
    %95 = vmatpush2.bf16.msra.mxu0 0
    %96 = vmatprep.subr.bf16.mxu0 0
    %97 = vmatpush2.bf16.msra.mxu0 0
    %98 = vmatprep.subr.bf16.mxu0 0
    %99 = vmatpush2.bf16.msra.mxu0 0
    %100 = vmatprep.subr.bf16.mxu0 0
    %101 = vmatpush2.bf16.msra.mxu0 0
    %102 = vmatprep.subr.bf16.mxu0 0
    %103 = vmatpush2.bf16.msra.mxu0 0
    %104 = vmatprep.subr.bf16.mxu0 0
    %105 = vmatpush2.bf16.msra.mxu0 0
    %106 = vmatprep.mubr.bf16.mxu0 0
    %107 = vmatmul.mubr.bf16.gmra.mxu0 %v72
    %v108 = vpop.f32.mrf.mxu0
    %v109 = vadd.f32 %v56, %v108
    %v110 = vpop.f32.mrf.mxu0
    %v111 = vpop.f32.mrf.mxu0
    %v112 = vadd.f32 %v56, %v111
    %v113 = vpop.f32.mrf.mxu0
    %114 = vdwg.mxu0
    %v115 = vpack.c.bf16 %v112, %v109
    %v117 = vunpack.c.l.b16 %v115
    %v118 = vunpack.c.h.b16 %v115
    %v119 = vpack.c.b16 %v117, %v117
    %v120 = vpack.c.b16 %v118, %v118
    %vm123 = vcmask 781312
    %124 = vst.msk [vmem:[#allocation7] sm:$0xf] %vm123, %v119
    %125 = vst.msk [vmem:[#allocation7 + $0x4] sm:$0xf] %vm123, %v120
    // Predicated region
    $region22: #{tpu_custom_call.1} parent=1 // pred_check
      _
    $region23: #{tpu_custom_call.1} parent=1 // pred_check_branch
      %127 = sbr.rel (0) target = $region25
    $region24: #{tpu_custom_call.1} parent=1 // pred_region
      %s129 = ssub.s32 128, 128
      %130 = vsyncadd [#allocation4], %s129
      %s131 = sshll.u32 [#allocation7], 4
      %s132 = int_to_ptr.vmem [resolvable:$true] %s131
      %137 = dma.vmem_to_hbm [thread:$0]  %s132, 128, %s3, [#allocation4], 64, 64, 4
    $region25: #{tpu_custom_call.1} parent=1 // pred_fallthru
      _
    // Predicated region
    $region26: #{tpu_custom_call.1} parent=1 // pred_check
      _
    $region27: #{tpu_custom_call.1} parent=1 // pred_check_branch
      %139 = sbr.rel (0) target = $region29
    $region28: #{tpu_custom_call.1} parent=1 // pred_region
      %140 = dma.done [#allocation4], 128
    $region29: #{tpu_custom_call.1} parent=1 // pred_fallthru
      _
    %141 = vsyncpa [#allocation3], 1
    %142 = vsyncpa [#allocation6], 1
    %143 = vsyncpa [#allocation4], 1

</llo_original>
